<compile_context>
chip_gen: v6e
topology: v6e:2x2x1
jax: 0.10.0
libtpu: 0.0.40
codegen_flags: <defaults>
</compile_context>

<pallas_src>
import math

import jax
import jax.numpy as jnp
from jax.experimental import pallas as pl
from jax.experimental.pallas import tpu as pltpu

HIDDEN_LAYER = 64
IN_FEATURES = 4
OUT_FEATURES = 2

# Batch tile (lane count per grid step). Multiple of 128; 256 matches the
# 2x256^2 MXU on v6e/v7x and is a clean 2x128 for v5e.
TB = 256


def dqn_kernel(x_ref, w1_ref, b1_ref, w2_ref, b2_ref, w3_ref, b3_ref,
               w4_ref, b4_ref, o_ref):
    # All operands for one batch tile fit easily in VMEM; fuse the 4 matmuls
    # + ReLUs. Batch is the lane axis, so every load/store is lane-dense.
    x = x_ref[...]                                                 # (4, TB)
    h = jnp.dot(w1_ref[...], x, preferred_element_type=jnp.float32) + b1_ref[...]
    h = jnp.maximum(h, 0.0)                                        # (64, TB)
    h = jnp.dot(w2_ref[...], h, preferred_element_type=jnp.float32) + b2_ref[...]
    h = jnp.maximum(h, 0.0)
    h = jnp.dot(w3_ref[...], h, preferred_element_type=jnp.float32) + b3_ref[...]
    h = jnp.maximum(h, 0.0)
    out = jnp.dot(w4_ref[...], h, preferred_element_type=jnp.float32) + b4_ref[...]
    o_ref[...] = out.astype(o_ref.dtype)                           # (2, TB)


def dqn_forward(x, params, *, tb=TB):
    """x: (B, 4) float32. params: dict of w1,b1,...,w4,b4 in (in,out)/(1,out) layout.

    Returns (B, 2) float32, identical semantics to the PyTorch DQN.forward.
    """
    B = x.shape[0]

    # --- layout plumbing (wrapper-side, done once per call) -----------------
    # Batch becomes the lane axis; weights become (out, in); biases (out, 1).
    xt = jnp.transpose(x)                       # (4, B)
    b_pad = pl.cdiv(B, tb) * tb                 # pad batch to a tile multiple
    if b_pad != B:
        xt = jnp.pad(xt, ((0, 0), (0, b_pad - B)))

    w1 = jnp.transpose(params["w1"])            # (64, 4)
    w2 = jnp.transpose(params["w2"])            # (64, 64)
    w3 = jnp.transpose(params["w3"])            # (64, 64)
    w4 = jnp.transpose(params["w4"])            # (2, 64)
    b1 = jnp.transpose(params["b1"])            # (64, 1)
    b2 = jnp.transpose(params["b2"])            # (64, 1)
    b3 = jnp.transpose(params["b3"])            # (64, 1)
    b4 = jnp.transpose(params["b4"])            # (2, 1)

    grid = (b_pad // tb,)

    def batch_tile_spec(rows):
        # (rows, tb) tile walking along the lane/batch axis.
        return pl.BlockSpec((rows, tb), lambda i: (0, i))

    def resident_spec(shape):
        # Full-array block, constant index_map -> stays pinned in VMEM.
        return pl.BlockSpec(shape, lambda i: (0, 0))

    out_t = pl.pallas_call(
        dqn_kernel,
        out_shape=jax.ShapeDtypeStruct((OUT_FEATURES, b_pad), jnp.float32),
        grid=grid,
        in_specs=[
            batch_tile_spec(IN_FEATURES),
            resident_spec(w1.shape), resident_spec(b1.shape),
            resident_spec(w2.shape), resident_spec(b2.shape),
            resident_spec(w3.shape), resident_spec(b3.shape),
            resident_spec(w4.shape), resident_spec(b4.shape),
        ],
        out_specs=batch_tile_spec(OUT_FEATURES),
        compiler_params=pltpu.CompilerParams(
            dimension_semantics=("parallel",)),
    )(xt, w1, b1, w2, b2, w3, b3, w4, b4)

    # Drop batch padding and return to (B, 2).
    return jnp.transpose(out_t[:, :B])


def init_params(key):
    """Deterministic init mimicking nn.Linear's U(-1/sqrt(fan_in), 1/sqrt(fan_in))."""
    dims = [(IN_FEATURES, HIDDEN_LAYER),
            (HIDDEN_LAYER, HIDDEN_LAYER),
            (HIDDEN_LAYER, HIDDEN_LAYER),
            (HIDDEN_LAYER, OUT_FEATURES)]
    params = {}
    for i, (fan_in, fan_out) in enumerate(dims, start=1):
        key, kw, kb = jax.random.split(key, 3)
        bound = 1.0 / math.sqrt(fan_in)
        params[f"w{i}"] = jax.random.uniform(
            kw, (fan_in, fan_out), jnp.float32, -bound, bound)
        params[f"b{i}"] = jax.random.uniform(
            kb, (1, fan_out), jnp.float32, -bound, bound)
    return params


def dqn_reference(x, params):
    h = jax.nn.relu(x @ params["w1"] + params["b1"])
    h = jax.nn.relu(h @ params["w2"] + params["b2"])
    h = jax.nn.relu(h @ params["w3"] + params["b3"])
    return h @ params["w4"] + params["b4"]


if __name__ == "__main__":
    key = jax.random.PRNGKey(0)
    key, kx = jax.random.split(key)
    B = 8  # small RL-actor style batch; kernel pads it to one 256-lane tile
    x = jax.random.normal(kx, (B, IN_FEATURES), jnp.float32)
    params = init_params(key)

    out = dqn_forward(x, params)
    out = jax.block_until_ready(out)

    ref = dqn_reference(x, params)
    assert out.shape == (B, OUT_FEATURES), out.shape
    assert jnp.allclose(out, ref, atol=1e-5, rtol=1e-5), (out, ref)

    # Also exercise a multi-tile batch to check the pipelined grid path.
    key, kx2 = jax.random.split(key)
    B2 = 1000  # non-multiple of the tile -> exercises padding + slicing
    x2 = jax.random.normal(kx2, (B2, IN_FEATURES), jnp.float32)
    out2 = jax.block_until_ready(dqn_forward(x2, params))
    ref2 = dqn_reference(x2, params)
    assert out2.shape == (B2, OUT_FEATURES), out2.shape
    assert jnp.allclose(out2, ref2, atol=1e-5, rtol=1e-5)

    print("KERNEL_OK")
</pallas_src>

<mosaic_0001>
module attributes {stable_mosaic.version = 11 : i64} {
  func.func @dqn_kernel(%arg0: i32, %arg1: memref<4x256xf32, #tpu.memory_space<vmem>>, %arg2: memref<64x4xf32, #tpu.memory_space<vmem>>, %arg3: memref<64x1xf32, #tpu.memory_space<vmem>>, %arg4: memref<64x64xf32, #tpu.memory_space<vmem>>, %arg5: memref<64x1xf32, #tpu.memory_space<vmem>>, %arg6: memref<64x64xf32, #tpu.memory_space<vmem>>, %arg7: memref<64x1xf32, #tpu.memory_space<vmem>>, %arg8: memref<2x64xf32, #tpu.memory_space<vmem>>, %arg9: memref<2x1xf32, #tpu.memory_space<vmem>>, %arg10: memref<2x256xf32, #tpu.memory_space<vmem>>) attributes {dimension_semantics = [#tpu.dimension_semantics<parallel>], iteration_bounds = array<i64: 1>, scalar_prefetch = 0 : i64, scratch_operands = 0 : i64, tpu.core_type = #tpu.core_type<tc>, window_params = [{transform_indices = @transform_0, window_bounds = array<i64: 4, 256>}, {pipeline_mode = #tpu.pipeline_mode<synchronous>, transform_indices = @transform_1, window_bounds = array<i64: 64, 4>}, {pipeline_mode = #tpu.pipeline_mode<synchronous>, transform_indices = @transform_2, window_bounds = array<i64: 64, 1>}, {pipeline_mode = #tpu.pipeline_mode<synchronous>, transform_indices = @transform_3, window_bounds = array<i64: 64, 64>}, {pipeline_mode = #tpu.pipeline_mode<synchronous>, transform_indices = @transform_4, window_bounds = array<i64: 64, 1>}, {pipeline_mode = #tpu.pipeline_mode<synchronous>, transform_indices = @transform_5, window_bounds = array<i64: 64, 64>}, {pipeline_mode = #tpu.pipeline_mode<synchronous>, transform_indices = @transform_6, window_bounds = array<i64: 64, 1>}, {pipeline_mode = #tpu.pipeline_mode<synchronous>, transform_indices = @transform_7, window_bounds = array<i64: 2, 64>}, {pipeline_mode = #tpu.pipeline_mode<synchronous>, transform_indices = @transform_8, window_bounds = array<i64: 2, 1>}, {transform_indices = @transform_9, window_bounds = array<i64: 2, 256>}]} {
    %c0 = arith.constant 0 : index
    %c0_0 = arith.constant 0 : index
    %0 = vector.load %arg1[%c0, %c0_0] : memref<4x256xf32, #tpu.memory_space<vmem>>, vector<4x256xf32>
    %c0_1 = arith.constant 0 : index
    %c0_2 = arith.constant 0 : index
    %1 = vector.load %arg2[%c0_1, %c0_2] : memref<64x4xf32, #tpu.memory_space<vmem>>, vector<64x4xf32>
    %cst = arith.constant dense<0.000000e+00> : vector<64x256xf32>
    %2 = tpu.matmul %1, %0, %cst {dimension_numbers = #tpu.dot_dimension_numbers<[1], [0], [0], [1], [0, 0, 1, 1], [], []>} : vector<64x4xf32>, vector<4x256xf32>, vector<64x256xf32> -> vector<64x256xf32>
    %c0_3 = arith.constant 0 : index
    %c0_4 = arith.constant 0 : index
    %3 = vector.load %arg3[%c0_3, %c0_4] : memref<64x1xf32, #tpu.memory_space<vmem>>, vector<64x1xf32>
    %4 = vector.broadcast %3 : vector<64x1xf32> to vector<64x256xf32>
    %5 = arith.addf %2, %4 : vector<64x256xf32>
    %cst_5 = arith.constant 0.000000e+00 : f32
    %6 = vector.broadcast %cst_5 : f32 to vector<64x256xf32>
    %7 = arith.maximumf %5, %6 : vector<64x256xf32>
    %c0_6 = arith.constant 0 : index
    %c0_7 = arith.constant 0 : index
    %8 = vector.load %arg4[%c0_6, %c0_7] : memref<64x64xf32, #tpu.memory_space<vmem>>, vector<64x64xf32>
    %cst_8 = arith.constant dense<0.000000e+00> : vector<64x256xf32>
    %9 = tpu.matmul %8, %7, %cst_8 {dimension_numbers = #tpu.dot_dimension_numbers<[1], [0], [0], [1], [0, 0, 1, 1], [], []>} : vector<64x64xf32>, vector<64x256xf32>, vector<64x256xf32> -> vector<64x256xf32>
    %c0_9 = arith.constant 0 : index
    %c0_10 = arith.constant 0 : index
    %10 = vector.load %arg5[%c0_9, %c0_10] : memref<64x1xf32, #tpu.memory_space<vmem>>, vector<64x1xf32>
    %11 = vector.broadcast %10 : vector<64x1xf32> to vector<64x256xf32>
    %12 = arith.addf %9, %11 : vector<64x256xf32>
    %cst_11 = arith.constant 0.000000e+00 : f32
    %13 = vector.broadcast %cst_11 : f32 to vector<64x256xf32>
    %14 = arith.maximumf %12, %13 : vector<64x256xf32>
    %c0_12 = arith.constant 0 : index
    %c0_13 = arith.constant 0 : index
    %15 = vector.load %arg6[%c0_12, %c0_13] : memref<64x64xf32, #tpu.memory_space<vmem>>, vector<64x64xf32>
    %cst_14 = arith.constant dense<0.000000e+00> : vector<64x256xf32>
    %16 = tpu.matmul %15, %14, %cst_14 {dimension_numbers = #tpu.dot_dimension_numbers<[1], [0], [0], [1], [0, 0, 1, 1], [], []>} : vector<64x64xf32>, vector<64x256xf32>, vector<64x256xf32> -> vector<64x256xf32>
    %c0_15 = arith.constant 0 : index
    %c0_16 = arith.constant 0 : index
    %17 = vector.load %arg7[%c0_15, %c0_16] : memref<64x1xf32, #tpu.memory_space<vmem>>, vector<64x1xf32>
    %18 = vector.broadcast %17 : vector<64x1xf32> to vector<64x256xf32>
    %19 = arith.addf %16, %18 : vector<64x256xf32>
    %cst_17 = arith.constant 0.000000e+00 : f32
    %20 = vector.broadcast %cst_17 : f32 to vector<64x256xf32>
    %21 = arith.maximumf %19, %20 : vector<64x256xf32>
    %c0_18 = arith.constant 0 : index
    %c0_19 = arith.constant 0 : index
    %22 = vector.load %arg8[%c0_18, %c0_19] : memref<2x64xf32, #tpu.memory_space<vmem>>, vector<2x64xf32>
    %cst_20 = arith.constant dense<0.000000e+00> : vector<2x256xf32>
    %23 = tpu.matmul %22, %21, %cst_20 {dimension_numbers = #tpu.dot_dimension_numbers<[1], [0], [0], [1], [0, 0, 1, 1], [], []>} : vector<2x64xf32>, vector<64x256xf32>, vector<2x256xf32> -> vector<2x256xf32>
    %c0_21 = arith.constant 0 : index
    %c0_22 = arith.constant 0 : index
    %24 = vector.load %arg9[%c0_21, %c0_22] : memref<2x1xf32, #tpu.memory_space<vmem>>, vector<2x1xf32>
    %25 = vector.broadcast %24 : vector<2x1xf32> to vector<2x256xf32>
    %26 = arith.addf %23, %25 : vector<2x256xf32>
    %c0_23 = arith.constant 0 : index
    %c0_24 = arith.constant 0 : index
    %27 = vector.load %arg10[%c0_23, %c0_24] : memref<2x256xf32, #tpu.memory_space<vmem>>, vector<2x256xf32>
    tpu.vector_store %arg10[%c0_23, %c0_24], %26 {strides = array<i32>} : memref<2x256xf32, #tpu.memory_space<vmem>>, vector<2x256xf32>,
    return
  }
  func.func @transform_0(%arg0: i32) -> (i32, i32) {
    %c0_i32 = arith.constant 0 : i32
    %c0_i32_0 = arith.constant 0 : i32
    return %c0_i32, %arg0 : i32, i32
  }
  func.func @transform_1(%arg0: i32) -> (i32, i32) {
    %c0_i32 = arith.constant 0 : i32
    %c0_i32_0 = arith.constant 0 : i32
    %c0_i32_1 = arith.constant 0 : i32
    return %c0_i32, %c0_i32_0 : i32, i32
  }
  func.func @transform_2(%arg0: i32) -> (i32, i32) {
    %c0_i32 = arith.constant 0 : i32
    %c0_i32_0 = arith.constant 0 : i32
    %c0_i32_1 = arith.constant 0 : i32
    return %c0_i32, %c0_i32_0 : i32, i32
  }
  func.func @transform_3(%arg0: i32) -> (i32, i32) {
    %c0_i32 = arith.constant 0 : i32
    %c0_i32_0 = arith.constant 0 : i32
    %c0_i32_1 = arith.constant 0 : i32
    return %c0_i32, %c0_i32_0 : i32, i32
  }
  func.func @transform_4(%arg0: i32) -> (i32, i32) {
    %c0_i32 = arith.constant 0 : i32
    %c0_i32_0 = arith.constant 0 : i32
    %c0_i32_1 = arith.constant 0 : i32
    return %c0_i32, %c0_i32_0 : i32, i32
  }
  func.func @transform_5(%arg0: i32) -> (i32, i32) {
    %c0_i32 = arith.constant 0 : i32
    %c0_i32_0 = arith.constant 0 : i32
    %c0_i32_1 = arith.constant 0 : i32
    return %c0_i32, %c0_i32_0 : i32, i32
  }
  func.func @transform_6(%arg0: i32) -> (i32, i32) {
    %c0_i32 = arith.constant 0 : i32
    %c0_i32_0 = arith.constant 0 : i32
    %c0_i32_1 = arith.constant 0 : i32
    return %c0_i32, %c0_i32_0 : i32, i32
  }
  func.func @transform_7(%arg0: i32) -> (i32, i32) {
    %c0_i32 = arith.constant 0 : i32
    %c0_i32_0 = arith.constant 0 : i32
    %c0_i32_1 = arith.constant 0 : i32
    return %c0_i32, %c0_i32_0 : i32, i32
  }
  func.func @transform_8(%arg0: i32) -> (i32, i32) {
    %c0_i32 = arith.constant 0 : i32
    %c0_i32_0 = arith.constant 0 : i32
    %c0_i32_1 = arith.constant 0 : i32
    return %c0_i32, %c0_i32_0 : i32, i32
  }
  func.func @transform_9(%arg0: i32) -> (i32, i32) {
    %c0_i32 = arith.constant 0 : i32
    %c0_i32_0 = arith.constant 0 : i32
    return %c0_i32, %arg0 : i32, i32
  }
}

</mosaic_0001>

<llo_original>
// kernel: tpu_custom_call.1
$region0: #{tpu_custom_call.1}
  #allocation0 [shape = 'u32[]', space=smem, size = 0x4, offset = 0x4, fixed_abs, tag = 'smem constant byte address 0x4 - core index']
  #allocation1 [shape = 'u32[144,128]{1,0:T(1,128)}', space=vmem, size = 0x12000, scoped, tag = 'internal scratch']
  %s0 = inlined_call_operand.vmem [shape: f32[4,256], index: 0, kind: input, shape index: {}]
  %s1 = inlined_call_operand.vmem [shape: f32[64,4], index: 1, kind: input, shape index: {}]
  %s2 = inlined_call_operand.vmem [shape: f32[64,1], index: 2, kind: input, shape index: {}]
  %s3 = inlined_call_operand.vmem [shape: f32[64,64], index: 3, kind: input, shape index: {}]
  %s4 = inlined_call_operand.vmem [shape: f32[64,1], index: 4, kind: input, shape index: {}]
  %s5 = inlined_call_operand.vmem [shape: f32[64,64], index: 5, kind: input, shape index: {}]
  %s6 = inlined_call_operand.vmem [shape: f32[64,1], index: 6, kind: input, shape index: {}]
  %s7 = inlined_call_operand.vmem [shape: f32[2,64], index: 7, kind: input, shape index: {}]
  %s8 = inlined_call_operand.vmem [shape: f32[2,1], index: 8, kind: input, shape index: {}]
  %s9 = inlined_call_operand.hbm [shape: f32[2,256], index: 9, kind: output, shape index: {}]
  %s10 = sld [smem:[#allocation0]]
  $region46: #{tpu_custom_call.1} parent=0
    _
  %s12 = ssub.s32 1, %s10
  %s13 = scalar_select 0, %s12, %s10
  $region1: #{tpu_custom_call.1} parent=0
    #allocation2 [shape = 'u8[2048]{0}', space=vmem, size = 0x800, scoped, tag = 'output window, operand 0, single buffered']
    #allocation3 [shape = 's32[1]{0}', space=sflag, size = 0x4, scoped, tag = 'scoped memory for tpu_custom_call.1']
    %14 = vsyncpa [#allocation3], 0
    // Predicated region
    $region2: #{tpu_custom_call.1} parent=1 // pred_check
      _
    $region3: #{tpu_custom_call.1} parent=1 // pred_check_branch
      %16 = sbr.rel (0) target = $region5
    $region4: #{tpu_custom_call.1} parent=1 // pred_region
      _
    $region5: #{tpu_custom_call.1} parent=1 // pred_fallthru
      _
    // Predicated region
    $region6: #{tpu_custom_call.1} parent=1 // pred_check
      _
    $region7: #{tpu_custom_call.1} parent=1 // pred_check_branch
      %18 = sbr.rel (0) target = $region9
    $region8: #{tpu_custom_call.1} parent=1 // pred_region
      _
    $region9: #{tpu_custom_call.1} parent=1 // pred_fallthru
      _
    // Predicated region
    $region10: #{tpu_custom_call.1} parent=1 // pred_check
      _
    $region11: #{tpu_custom_call.1} parent=1 // pred_check_branch
      %20 = sbr.rel (0) target = $region13
    $region12: #{tpu_custom_call.1} parent=1 // pred_region
      _
    $region13: #{tpu_custom_call.1} parent=1 // pred_fallthru
      _
    // Predicated region
    $region14: #{tpu_custom_call.1} parent=1 // pred_check
      _
    $region15: #{tpu_custom_call.1} parent=1 // pred_check_branch
      %22 = sbr.rel (0) target = $region17
    $region16: #{tpu_custom_call.1} parent=1 // pred_region
      _
    $region17: #{tpu_custom_call.1} parent=1 // pred_fallthru
      _
    // Predicated region
    $region18: #{tpu_custom_call.1} parent=1 // pred_check
      _
    $region19: #{tpu_custom_call.1} parent=1 // pred_check_branch
      %24 = sbr.rel (0) target = $region21
    $region20: #{tpu_custom_call.1} parent=1 // pred_region
      _
    $region21: #{tpu_custom_call.1} parent=1 // pred_fallthru
      _
    // Predicated region
    $region22: #{tpu_custom_call.1} parent=1 // pred_check
      _
    $region23: #{tpu_custom_call.1} parent=1 // pred_check_branch
      %26 = sbr.rel (0) target = $region25
    $region24: #{tpu_custom_call.1} parent=1 // pred_region
      _
    $region25: #{tpu_custom_call.1} parent=1 // pred_fallthru
      _
    // Predicated region
    $region26: #{tpu_custom_call.1} parent=1 // pred_check
      _
    $region27: #{tpu_custom_call.1} parent=1 // pred_check_branch
      %28 = sbr.rel (0) target = $region29
    $region28: #{tpu_custom_call.1} parent=1 // pred_region
      _
    $region29: #{tpu_custom_call.1} parent=1 // pred_fallthru
      _
    // Predicated region
    $region30: #{tpu_custom_call.1} parent=1 // pred_check
      _
    $region31: #{tpu_custom_call.1} parent=1 // pred_check_branch
      %30 = sbr.rel (0) target = $region33
    $region32: #{tpu_custom_call.1} parent=1 // pred_region
      _
    $region33: #{tpu_custom_call.1} parent=1 // pred_fallthru
      _
    // Predicated region
    $region34: #{tpu_custom_call.1} parent=1 // pred_check
      _
    $region35: #{tpu_custom_call.1} parent=1 // pred_check_branch
      %32 = sbr.rel (0) target = $region37
    $region36: #{tpu_custom_call.1} parent=1 // pred_region
      _
    $region37: #{tpu_custom_call.1} parent=1 // pred_fallthru
      _
    %v33 = vld [vmem:[%s0] sm:$0xff]
    %v34 = vld [vmem:[%s1] sm:$0xff]
    %v35 = vld [vmem:[%s1 + $0x8] sm:$0xff]
    %v36 = vld [vmem:[%s1 + $0x10] sm:$0xff]
    %v37 = vld [vmem:[%s1 + $0x18] sm:$0xff]
    %v38 = vld [vmem:[%s1 + $0x20] sm:$0xff]
    %v39 = vld [vmem:[%s1 + $0x28] sm:$0xff]
    %v40 = vld [vmem:[%s1 + $0x30] sm:$0xff]
    %v41 = vld [vmem:[%s1 + $0x38] sm:$0xff]
    %v42 = vld [vmem:[%s2] sm:$0xff]
    %v43 = vld [vmem:[%s2 + $0x8] sm:$0xff]
    %v44 = vld [vmem:[%s2 + $0x10] sm:$0xff]
    %v45 = vld [vmem:[%s2 + $0x18] sm:$0xff]
    %v46 = vld [vmem:[%s2 + $0x20] sm:$0xff]
    %v47 = vld [vmem:[%s2 + $0x28] sm:$0xff]
    %v48 = vld [vmem:[%s2 + $0x30] sm:$0xff]
    %v49 = vld [vmem:[%s2 + $0x38] sm:$0xff]
    %51 = vset.pattern.permute.xlu0 0
    %52 = vperm.xlu0 %51, %v42
    %v53 = vpop.permute.xlu0 %52
    %56 = vset.pattern.permute.xlu0 0
    %57 = vperm.xlu0 %56, %v43
    %v58 = vpop.permute.xlu0 %57
    %61 = vset.pattern.permute.xlu0 0
    %62 = vperm.xlu0 %61, %v44
    %v63 = vpop.permute.xlu0 %62
    %66 = vset.pattern.permute.xlu0 0
    %67 = vperm.xlu0 %66, %v45
    %v68 = vpop.permute.xlu0 %67
    %71 = vset.pattern.permute.xlu0 0
    %72 = vperm.xlu0 %71, %v46
    %v73 = vpop.permute.xlu0 %72
    %76 = vset.pattern.permute.xlu0 0
    %77 = vperm.xlu0 %76, %v47
    %v78 = vpop.permute.xlu0 %77
    %81 = vset.pattern.permute.xlu0 0
    %82 = vperm.xlu0 %81, %v48
    %v83 = vpop.permute.xlu0 %82
    %86 = vset.pattern.permute.xlu0 0
    %87 = vperm.xlu0 %86, %v49
    %v88 = vpop.permute.xlu0 %87
    %v91 = vcombine.high %v33, %v33
    %vm92 = vcmask 31744
    %v94 = vsel %vm92, %v34, 0
    %v97 = vsel %vm92, %v35, 0
    %v100 = vsel %vm92, %v36, 0
    %v103 = vsel %vm92, %v37, 0
    %v106 = vsel %vm92, %v38, 0
    %v109 = vsel %vm92, %v39, 0
    %v112 = vsel %vm92, %v40, 0
    %v115 = vsel %vm92, %v41, 0
    %vm117 = vcmask 1043456
    %v118 = vsel %vm117, %v33, 0
    %v120 = vsel %vm117, %v91, 0
    %122 = vmatprep.subr.mxu0 0.0
    %123 = vmatpush1.msra.mxu0 0.0
    %124 = vmatprep.subr.mxu0 0.0
    %125 = vmatpush1.msra.mxu0 0.0
    %126 = vmatprep.subr.mxu0 0.0
    %127 = vmatpush1.msra.mxu0 0.0
    %128 = vmatprep.subr.mxu0 0.0
    %129 = vmatpush1.msra.mxu0 0.0
    %130 = vmatprep.subr.mxu0 0.0
    %131 = vmatpush1.msra.mxu0 0.0
    %132 = vmatprep.subr.mxu0 0.0
    %133 = vmatpush1.msra.mxu0 0.0
    %134 = vmatprep.subr.mxu0 0.0
    %135 = vmatpush1.msra.mxu0 0.0
    %136 = vmatprep.subr.mxu0 0.0
    %137 = vmatpush1.msra.mxu0 0.0
    %138 = vmatprep.subr.mxu0 0.0
    %139 = vmatpush1.msra.mxu0 0.0
    %140 = vmatprep.subr.mxu0 0.0
    %141 = vmatpush1.msra.mxu0 0.0
    %142 = vmatprep.subr.mxu0 0.0
    %143 = vmatpush1.msra.mxu0 0.0
    %144 = vmatprep.subr.mxu0 0.0
    %145 = vmatpush1.msra.mxu0 0.0
    %146 = vmatprep.subr.mxu0 0.0
    %147 = vmatpush1.msra.mxu0 0.0
    %148 = vmatprep.subr.mxu0 0.0
    %149 = vmatpush1.msra.mxu0 0.0
    %150 = vmatprep.subr.mxu0 0.0
    %151 = vmatpush1.msra.mxu0 0.0
    %152 = vmatprep.subr.mxu0 %v120
    %153 = vmatpush1.msra.mxu0 %v118
    %154 = vmatprep.subr.mxu0 0.0
    %155 = vmatpush2.msra.mxu0 0.0
    %156 = vmatprep.subr.mxu0 0.0
    %157 = vmatpush2.msra.mxu0 0.0
    %158 = vmatprep.subr.mxu0 0.0
    %159 = vmatpush2.msra.mxu0 0.0
    %160 = vmatprep.subr.mxu0 0.0
    %161 = vmatpush2.msra.mxu0 0.0
    %162 = vmatprep.subr.mxu0 0.0
    %163 = vmatpush2.msra.mxu0 0.0
    %164 = vmatprep.subr.mxu0 0.0
    %165 = vmatpush2.msra.mxu0 0.0
    %166 = vmatprep.subr.mxu0 0.0
    %167 = vmatpush2.msra.mxu0 0.0
    %168 = vmatprep.subr.mxu0 0.0
    %169 = vmatpush2.msra.mxu0 0.0
    %170 = vmatprep.subr.mxu0 0.0
    %171 = vmatpush2.msra.mxu0 0.0
    %172 = vmatprep.subr.mxu0 0.0
    %173 = vmatpush2.msra.mxu0 0.0
    %174 = vmatprep.subr.mxu0 0.0
    %175 = vmatpush2.msra.mxu0 0.0
    %176 = vmatprep.subr.mxu0 0.0
    %177 = vmatpush2.msra.mxu0 0.0
    %178 = vmatprep.subr.mxu0 0.0
    %179 = vmatpush2.msra.mxu0 0.0
    %180 = vmatprep.subr.mxu0 0.0
    %181 = vmatpush2.msra.mxu0 0.0
    %182 = vmatprep.subr.mxu0 0.0
    %183 = vmatpush2.msra.mxu0 0.0
    %184 = vmatprep.subr.mxu0 0.0
    %185 = vmatpush2.msra.mxu0 0.0
    %186 = vmatprep.mubr.f32.mxu0 0.0
    %187 = vmatmul.mubr.f32.gmra.mxu0 %v94
    %v188 = vpop.f32.mrf.mxu0
    %v189 = vadd.f32 %v53, %v188
    %v190 = vpop.f32.mrf.mxu0
    %v191 = vadd.f32 %v53, %v190
    %192 = vmatprep.mubr.f32.mxu0 0.0
    %193 = vmatmul.mubr.f32.gmra.mxu0 %v97
    %v194 = vpop.f32.mrf.mxu0
    %v195 = vadd.f32 %v58, %v194
    %v196 = vpop.f32.mrf.mxu0
    %v197 = vadd.f32 %v58, %v196
    %198 = vmatprep.mubr.f32.mxu0 0.0
    %199 = vmatmul.mubr.f32.gmra.mxu0 %v100
    %v200 = vpop.f32.mrf.mxu0
    %v201 = vadd.f32 %v63, %v200
    %v202 = vpop.f32.mrf.mxu0
    %v203 = vadd.f32 %v63, %v202
    %204 = vmatprep.mubr.f32.mxu0 0.0
    %205 = vmatmul.mubr.f32.gmra.mxu0 %v103
    %v206 = vpop.f32.mrf.mxu0
    %v207 = vadd.f32 %v68, %v206
    %v208 = vpop.f32.mrf.mxu0
    %v209 = vadd.f32 %v68, %v208
    %210 = vmatprep.mubr.f32.mxu0 0.0
    %211 = vmatmul.mubr.f32.gmra.mxu0 %v106
    %v212 = vpop.f32.mrf.mxu0
    %v213 = vadd.f32 %v73, %v212
    %v214 = vpop.f32.mrf.mxu0
    %v215 = vadd.f32 %v73, %v214
    %216 = vmatprep.mubr.f32.mxu0 0.0
    %217 = vmatmul.mubr.f32.gmra.mxu0 %v109
    %v218 = vpop.f32.mrf.mxu0
    %v219 = vadd.f32 %v78, %v218
    %v220 = vpop.f32.mrf.mxu0
    %v221 = vadd.f32 %v78, %v220
    %222 = vmatprep.mubr.f32.mxu0 0.0
    %223 = vmatmul.mubr.f32.gmra.mxu0 %v112
    %v224 = vpop.f32.mrf.mxu0
    %v225 = vadd.f32 %v83, %v224
    %v226 = vpop.f32.mrf.mxu0
    %v227 = vadd.f32 %v83, %v226
    %228 = vmatprep.mubr.f32.mxu0 0.0
    %229 = vmatmul.mubr.f32.gmra.mxu0 %v115
    %v230 = vpop.f32.mrf.mxu0
    %v231 = vadd.f32 %v88, %v230
    %v232 = vpop.f32.mrf.mxu0
    %v233 = vadd.f32 %v88, %v232
    %234 = vdwg.mxu0
    %v235 = vmax.f32 %v189, 0.0
    %v236 = vmax.f32 %v191, 0.0
    %v237 = vmax.f32 %v195, 0.0
    %v238 = vmax.f32 %v197, 0.0
    %v239 = vmax.f32 %v201, 0.0
    %v240 = vmax.f32 %v203, 0.0
    %v241 = vmax.f32 %v207, 0.0
    %v242 = vmax.f32 %v209, 0.0
    %v243 = vmax.f32 %v213, 0.0
    %v244 = vmax.f32 %v215, 0.0
    %v245 = vmax.f32 %v219, 0.0
    %v246 = vmax.f32 %v221, 0.0
    %v247 = vmax.f32 %v225, 0.0
    %v248 = vmax.f32 %v227, 0.0
    %v249 = vmax.f32 %v231, 0.0
    %v250 = vmax.f32 %v233, 0.0
    %v251 = vld [vmem:[%s3] sm:$0xff]
    %v252 = vld [vmem:[%s3 + $0x8] sm:$0xff]
    %v253 = vld [vmem:[%s3 + $0x10] sm:$0xff]
    %v254 = vld [vmem:[%s3 + $0x18] sm:$0xff]
    %v255 = vld [vmem:[%s3 + $0x20] sm:$0xff]
    %v256 = vld [vmem:[%s3 + $0x28] sm:$0xff]
    %v257 = vld [vmem:[%s3 + $0x30] sm:$0xff]
    %v258 = vld [vmem:[%s3 + $0x38] sm:$0xff]
    %v259 = vld [vmem:[%s4] sm:$0xff]
    %v260 = vld [vmem:[%s4 + $0x8] sm:$0xff]
    %v261 = vld [vmem:[%s4 + $0x10] sm:$0xff]
    %v262 = vld [vmem:[%s4 + $0x18] sm:$0xff]
    %v263 = vld [vmem:[%s4 + $0x20] sm:$0xff]
    %v264 = vld [vmem:[%s4 + $0x28] sm:$0xff]
    %v265 = vld [vmem:[%s4 + $0x30] sm:$0xff]
    %v266 = vld [vmem:[%s4 + $0x38] sm:$0xff]
    %268 = vset.pattern.permute.xlu0 0
    %269 = vperm.xlu0 %268, %v259
    %v270 = vpop.permute.xlu0 %269
    %273 = vset.pattern.permute.xlu0 0
    %274 = vperm.xlu0 %273, %v260
    %v275 = vpop.permute.xlu0 %274
    %278 = vset.pattern.permute.xlu0 0
    %279 = vperm.xlu0 %278, %v261
    %v280 = vpop.permute.xlu0 %279
    %283 = vset.pattern.permute.xlu0 0
    %284 = vperm.xlu0 %283, %v262
    %v285 = vpop.permute.xlu0 %284
    %288 = vset.pattern.permute.xlu0 0
    %289 = vperm.xlu0 %288, %v263
    %v290 = vpop.permute.xlu0 %289
    %293 = vset.pattern.permute.xlu0 0
    %294 = vperm.xlu0 %293, %v264
    %v295 = vpop.permute.xlu0 %294
    %298 = vset.pattern.permute.xlu0 0
    %299 = vperm.xlu0 %298, %v265
    %v300 = vpop.permute.xlu0 %299
    %303 = vset.pattern.permute.xlu0 0
    %304 = vperm.xlu0 %303, %v266
    %v305 = vpop.permute.xlu0 %304
    %vm307 = vcmask 523264
    %v309 = vsel %vm307, %v251, 0
    %v312 = vsel %vm307, %v252, 0
    %v315 = vsel %vm307, %v253, 0
    %v318 = vsel %vm307, %v254, 0
    %v321 = vsel %vm307, %v255, 0
    %v324 = vsel %vm307, %v256, 0
    %v327 = vsel %vm307, %v257, 0
    %v330 = vsel %vm307, %v258, 0
    %332 = vmatprep.subr.mxu0 0.0
    %333 = vmatpush1.msra.mxu0 0.0
    %334 = vmatprep.subr.mxu0 0.0
    %335 = vmatpush1.msra.mxu0 0.0
    %336 = vmatprep.subr.mxu0 0.0
    %337 = vmatpush1.msra.mxu0 0.0
    %338 = vmatprep.subr.mxu0 0.0
    %339 = vmatpush1.msra.mxu0 0.0
    %340 = vmatprep.subr.mxu0 0.0
    %341 = vmatpush1.msra.mxu0 0.0
    %342 = vmatprep.subr.mxu0 0.0
    %343 = vmatpush1.msra.mxu0 0.0
    %344 = vmatprep.subr.mxu0 0.0
    %345 = vmatpush1.msra.mxu0 0.0
    %346 = vmatprep.subr.mxu0 0.0
    %347 = vmatpush1.msra.mxu0 0.0
    %348 = vmatprep.subr.mxu0 %v250
    %349 = vmatpush1.msra.mxu0 %v249
    %350 = vmatprep.subr.mxu0 %v248
    %351 = vmatpush1.msra.mxu0 %v247
    %352 = vmatprep.subr.mxu0 %v246
    %353 = vmatpush1.msra.mxu0 %v245
    %354 = vmatprep.subr.mxu0 %v244
    %355 = vmatpush1.msra.mxu0 %v243
    %356 = vmatprep.subr.mxu0 %v242
    %357 = vmatpush1.msra.mxu0 %v241
    %358 = vmatprep.subr.mxu0 %v240
    %359 = vmatpush1.msra.mxu0 %v239
    %360 = vmatprep.subr.mxu0 %v238
    %361 = vmatpush1.msra.mxu0 %v237
    %362 = vmatprep.subr.mxu0 %v236
    %363 = vmatpush1.msra.mxu0 %v235
    %364 = vmatprep.subr.mxu0 0.0
    %365 = vmatpush2.msra.mxu0 0.0
    %366 = vmatprep.subr.mxu0 0.0
    %367 = vmatpush2.msra.mxu0 0.0
    %368 = vmatprep.subr.mxu0 0.0
    %369 = vmatpush2.msra.mxu0 0.0
    %370 = vmatprep.subr.mxu0 0.0
    %371 = vmatpush2.msra.mxu0 0.0
    %372 = vmatprep.subr.mxu0 0.0
    %373 = vmatpush2.msra.mxu0 0.0
    %374 = vmatprep.subr.mxu0 0.0
    %375 = vmatpush2.msra.mxu0 0.0
    %376 = vmatprep.subr.mxu0 0.0
    %377 = vmatpush2.msra.mxu0 0.0
    %378 = vmatprep.subr.mxu0 0.0
    %379 = vmatpush2.msra.mxu0 0.0
    %380 = vmatprep.subr.mxu0 0.0
    %381 = vmatpush2.msra.mxu0 0.0
    %382 = vmatprep.subr.mxu0 0.0
    %383 = vmatpush2.msra.mxu0 0.0
    %384 = vmatprep.subr.mxu0 0.0
    %385 = vmatpush2.msra.mxu0 0.0
    %386 = vmatprep.subr.mxu0 0.0
    %387 = vmatpush2.msra.mxu0 0.0
    %388 = vmatprep.subr.mxu0 0.0
    %389 = vmatpush2.msra.mxu0 0.0
    %390 = vmatprep.subr.mxu0 0.0
    %391 = vmatpush2.msra.mxu0 0.0
    %392 = vmatprep.subr.mxu0 0.0
    %393 = vmatpush2.msra.mxu0 0.0
    %394 = vmatprep.subr.mxu0 0.0
    %395 = vmatpush2.msra.mxu0 0.0
    %396 = vmatprep.mubr.f32.mxu0 0.0
    %397 = vmatmul.mubr.f32.gmra.mxu0 %v309
    %v398 = vpop.f32.mrf.mxu0
    %v399 = vadd.f32 %v270, %v398
    %v400 = vpop.f32.mrf.mxu0
    %v401 = vadd.f32 %v270, %v400
    %402 = vmatprep.mubr.f32.mxu0 0.0
    %403 = vmatmul.mubr.f32.gmra.mxu0 %v312
    %v404 = vpop.f32.mrf.mxu0
    %v405 = vadd.f32 %v275, %v404
    %v406 = vpop.f32.mrf.mxu0
    %v407 = vadd.f32 %v275, %v406
    %408 = vmatprep.mubr.f32.mxu0 0.0
    %409 = vmatmul.mubr.f32.gmra.mxu0 %v315
    %v410 = vpop.f32.mrf.mxu0
    %v411 = vadd.f32 %v280, %v410
    %v412 = vpop.f32.mrf.mxu0
    %v413 = vadd.f32 %v280, %v412
    %414 = vmatprep.mubr.f32.mxu0 0.0
    %415 = vmatmul.mubr.f32.gmra.mxu0 %v318
    %v416 = vpop.f32.mrf.mxu0
    %v417 = vadd.f32 %v285, %v416
    %v418 = vpop.f32.mrf.mxu0
    %v419 = vadd.f32 %v285, %v418
    %420 = vmatprep.mubr.f32.mxu0 0.0
    %421 = vmatmul.mubr.f32.gmra.mxu0 %v321
    %v422 = vpop.f32.mrf.mxu0
    %v423 = vadd.f32 %v290, %v422
    %v424 = vpop.f32.mrf.mxu0
    %v425 = vadd.f32 %v290, %v424
    %426 = vmatprep.mubr.f32.mxu0 0.0
    %427 = vmatmul.mubr.f32.gmra.mxu0 %v324
    %v428 = vpop.f32.mrf.mxu0
    %v429 = vadd.f32 %v295, %v428
    %v430 = vpop.f32.mrf.mxu0
    %v431 = vadd.f32 %v295, %v430
    %432 = vmatprep.mubr.f32.mxu0 0.0
    %433 = vmatmul.mubr.f32.gmra.mxu0 %v327
    %v434 = vpop.f32.mrf.mxu0
    %v435 = vadd.f32 %v300, %v434
    %v436 = vpop.f32.mrf.mxu0
    %v437 = vadd.f32 %v300, %v436
    %438 = vmatprep.mubr.f32.mxu0 0.0
    %439 = vmatmul.mubr.f32.gmra.mxu0 %v330
    %v440 = vpop.f32.mrf.mxu0
    %v441 = vadd.f32 %v305, %v440
    %v442 = vpop.f32.mrf.mxu0
    %v443 = vadd.f32 %v305, %v442
    %444 = vdwg.mxu0
    %v445 = vmax.f32 %v399, 0.0
    %v446 = vmax.f32 %v401, 0.0
    %v447 = vmax.f32 %v405, 0.0
    %v448 = vmax.f32 %v407, 0.0
    %v449 = vmax.f32 %v411, 0.0
    %v450 = vmax.f32 %v413, 0.0
    %v451 = vmax.f32 %v417, 0.0
    %v452 = vmax.f32 %v419, 0.0
    %v453 = vmax.f32 %v423, 0.0
    %v454 = vmax.f32 %v425, 0.0
    %v455 = vmax.f32 %v429, 0.0
    %v456 = vmax.f32 %v431, 0.0
    %v457 = vmax.f32 %v435, 0.0
    %v458 = vmax.f32 %v437, 0.0
    %v459 = vmax.f32 %v441, 0.0
    %v460 = vmax.f32 %v443, 0.0
    %v461 = vld [vmem:[%s5] sm:$0xff]
    %v462 = vld [vmem:[%s5 + $0x8] sm:$0xff]
    %v463 = vld [vmem:[%s5 + $0x10] sm:$0xff]
    %v464 = vld [vmem:[%s5 + $0x18] sm:$0xff]
    %v465 = vld [vmem:[%s5 + $0x20] sm:$0xff]
    %v466 = vld [vmem:[%s5 + $0x28] sm:$0xff]
    %v467 = vld [vmem:[%s5 + $0x30] sm:$0xff]
    %v468 = vld [vmem:[%s5 + $0x38] sm:$0xff]
    %v469 = vld [vmem:[%s6] sm:$0xff]
    %v470 = vld [vmem:[%s6 + $0x8] sm:$0xff]
    %v471 = vld [vmem:[%s6 + $0x10] sm:$0xff]
    %v472 = vld [vmem:[%s6 + $0x18] sm:$0xff]
    %v473 = vld [vmem:[%s6 + $0x20] sm:$0xff]
    %v474 = vld [vmem:[%s6 + $0x28] sm:$0xff]
    %v475 = vld [vmem:[%s6 + $0x30] sm:$0xff]
    %v476 = vld [vmem:[%s6 + $0x38] sm:$0xff]
    %478 = vset.pattern.permute.xlu0 0
    %479 = vperm.xlu0 %478, %v469
    %v480 = vpop.permute.xlu0 %479
    %483 = vset.pattern.permute.xlu0 0
    %484 = vperm.xlu0 %483, %v470
    %v485 = vpop.permute.xlu0 %484
    %488 = vset.pattern.permute.xlu0 0
    %489 = vperm.xlu0 %488, %v471
    %v490 = vpop.permute.xlu0 %489
    %493 = vset.pattern.permute.xlu0 0
    %494 = vperm.xlu0 %493, %v472
    %v495 = vpop.permute.xlu0 %494
    %498 = vset.pattern.permute.xlu0 0
    %499 = vperm.xlu0 %498, %v473
    %v500 = vpop.permute.xlu0 %499
    %503 = vset.pattern.permute.xlu0 0
    %504 = vperm.xlu0 %503, %v474
    %v505 = vpop.permute.xlu0 %504
    %508 = vset.pattern.permute.xlu0 0
    %509 = vperm.xlu0 %508, %v475
    %v510 = vpop.permute.xlu0 %509
    %513 = vset.pattern.permute.xlu0 0
    %514 = vperm.xlu0 %513, %v476
    %v515 = vpop.permute.xlu0 %514
    %v518 = vsel %vm307, %v461, 0
    %v521 = vsel %vm307, %v462, 0
    %v524 = vsel %vm307, %v463, 0
    %v527 = vsel %vm307, %v464, 0
    %v530 = vsel %vm307, %v465, 0
    %v533 = vsel %vm307, %v466, 0
    %v536 = vsel %vm307, %v467, 0
    %v539 = vsel %vm307, %v468, 0
    %541 = vmatprep.subr.mxu0 0.0
    %542 = vmatpush1.msra.mxu0 0.0
    %543 = vmatprep.subr.mxu0 0.0
    %544 = vmatpush1.msra.mxu0 0.0
    %545 = vmatprep.subr.mxu0 0.0
    %546 = vmatpush1.msra.mxu0 0.0
    %547 = vmatprep.subr.mxu0 0.0
    %548 = vmatpush1.msra.mxu0 0.0
    %549 = vmatprep.subr.mxu0 0.0
    %550 = vmatpush1.msra.mxu0 0.0
    %551 = vmatprep.subr.mxu0 0.0
    %552 = vmatpush1.msra.mxu0 0.0
    %553 = vmatprep.subr.mxu0 0.0
    %554 = vmatpush1.msra.mxu0 0.0
    %555 = vmatprep.subr.mxu0 0.0
    %556 = vmatpush1.msra.mxu0 0.0
    %557 = vmatprep.subr.mxu0 %v460
    %558 = vmatpush1.msra.mxu0 %v459
    %559 = vmatprep.subr.mxu0 %v458
    %560 = vmatpush1.msra.mxu0 %v457
    %561 = vmatprep.subr.mxu0 %v456
    %562 = vmatpush1.msra.mxu0 %v455
    %563 = vmatprep.subr.mxu0 %v454
    %564 = vmatpush1.msra.mxu0 %v453
    %565 = vmatprep.subr.mxu0 %v452
    %566 = vmatpush1.msra.mxu0 %v451
    %567 = vmatprep.subr.mxu0 %v450
    %568 = vmatpush1.msra.mxu0 %v449
    %569 = vmatprep.subr.mxu0 %v448
    %570 = vmatpush1.msra.mxu0 %v447
    %571 = vmatprep.subr.mxu0 %v446
    %572 = vmatpush1.msra.mxu0 %v445
    %573 = vmatprep.subr.mxu0 0.0
    %574 = vmatpush2.msra.mxu0 0.0
    %575 = vmatprep.subr.mxu0 0.0
    %576 = vmatpush2.msra.mxu0 0.0
    %577 = vmatprep.subr.mxu0 0.0
    %578 = vmatpush2.msra.mxu0 0.0
    %579 = vmatprep.subr.mxu0 0.0
    %580 = vmatpush2.msra.mxu0 0.0
    %581 = vmatprep.subr.mxu0 0.0
    %582 = vmatpush2.msra.mxu0 0.0
    %583 = vmatprep.subr.mxu0 0.0
    %584 = vmatpush2.msra.mxu0 0.0
    %585 = vmatprep.subr.mxu0 0.0
    %586 = vmatpush2.msra.mxu0 0.0
    %587 = vmatprep.subr.mxu0 0.0
    %588 = vmatpush2.msra.mxu0 0.0
    %589 = vmatprep.subr.mxu0 0.0
    %590 = vmatpush2.msra.mxu0 0.0
    %591 = vmatprep.subr.mxu0 0.0
    %592 = vmatpush2.msra.mxu0 0.0
    %593 = vmatprep.subr.mxu0 0.0
    %594 = vmatpush2.msra.mxu0 0.0
    %595 = vmatprep.subr.mxu0 0.0
    %596 = vmatpush2.msra.mxu0 0.0
    %597 = vmatprep.subr.mxu0 0.0
    %598 = vmatpush2.msra.mxu0 0.0
    %599 = vmatprep.subr.mxu0 0.0
    %600 = vmatpush2.msra.mxu0 0.0
    %601 = vmatprep.subr.mxu0 0.0
    %602 = vmatpush2.msra.mxu0 0.0
    %603 = vmatprep.subr.mxu0 0.0
    %604 = vmatpush2.msra.mxu0 0.0
    %605 = vmatprep.mubr.f32.mxu0 0.0
    %606 = vmatmul.mubr.f32.gmra.mxu0 %v518
    %v607 = vpop.f32.mrf.mxu0
    %v608 = vadd.f32 %v480, %v607
    %v609 = vpop.f32.mrf.mxu0
    %v610 = vadd.f32 %v480, %v609
    %611 = vmatprep.mubr.f32.mxu0 0.0
    %612 = vmatmul.mubr.f32.gmra.mxu0 %v521
    %v613 = vpop.f32.mrf.mxu0
    %v614 = vadd.f32 %v485, %v613
    %v615 = vpop.f32.mrf.mxu0
    %v616 = vadd.f32 %v485, %v615
    %617 = vmatprep.mubr.f32.mxu0 0.0
    %618 = vmatmul.mubr.f32.gmra.mxu0 %v524
    %v619 = vpop.f32.mrf.mxu0
    %v620 = vadd.f32 %v490, %v619
    %v621 = vpop.f32.mrf.mxu0
    %v622 = vadd.f32 %v490, %v621
    %623 = vmatprep.mubr.f32.mxu0 0.0
    %624 = vmatmul.mubr.f32.gmra.mxu0 %v527
    %v625 = vpop.f32.mrf.mxu0
    %v626 = vadd.f32 %v495, %v625
    %v627 = vpop.f32.mrf.mxu0
    %v628 = vadd.f32 %v495, %v627
    %629 = vmatprep.mubr.f32.mxu0 0.0
    %630 = vmatmul.mubr.f32.gmra.mxu0 %v530
    %v631 = vpop.f32.mrf.mxu0
    %v632 = vadd.f32 %v500, %v631
    %v633 = vpop.f32.mrf.mxu0
    %v634 = vadd.f32 %v500, %v633
    %635 = vmatprep.mubr.f32.mxu0 0.0
    %636 = vmatmul.mubr.f32.gmra.mxu0 %v533
    %v637 = vpop.f32.mrf.mxu0
    %v638 = vadd.f32 %v505, %v637
    %v639 = vpop.f32.mrf.mxu0
    %v640 = vadd.f32 %v505, %v639
    %641 = vmatprep.mubr.f32.mxu0 0.0
    %642 = vmatmul.mubr.f32.gmra.mxu0 %v536
    %v643 = vpop.f32.mrf.mxu0
    %v644 = vadd.f32 %v510, %v643
    %v645 = vpop.f32.mrf.mxu0
    %v646 = vadd.f32 %v510, %v645
    %647 = vmatprep.mubr.f32.mxu0 0.0
    %648 = vmatmul.mubr.f32.gmra.mxu0 %v539
    %v649 = vpop.f32.mrf.mxu0
    %v650 = vadd.f32 %v515, %v649
    %v651 = vpop.f32.mrf.mxu0
    %v652 = vadd.f32 %v515, %v651
    %653 = vdwg.mxu0
    %v654 = vmax.f32 %v608, 0.0
    %v655 = vmax.f32 %v610, 0.0
    %v656 = vmax.f32 %v614, 0.0
    %v657 = vmax.f32 %v616, 0.0
    %v658 = vmax.f32 %v620, 0.0
    %v659 = vmax.f32 %v622, 0.0
    %v660 = vmax.f32 %v626, 0.0
    %v661 = vmax.f32 %v628, 0.0
    %v662 = vmax.f32 %v632, 0.0
    %v663 = vmax.f32 %v634, 0.0
    %v664 = vmax.f32 %v638, 0.0
    %v665 = vmax.f32 %v640, 0.0
    %v666 = vmax.f32 %v644, 0.0
    %v667 = vmax.f32 %v646, 0.0
    %v668 = vmax.f32 %v650, 0.0
    %v669 = vmax.f32 %v652, 0.0
    %v670 = vld [vmem:[%s7] sm:$0x3]
    %v671 = vld [vmem:[%s8] sm:$0x3]
    %673 = vset.pattern.permute.xlu0 0
    %674 = vperm.xlu0 %673, %v671
    %v675 = vpop.permute.xlu0 %674
    %v678 = vsel %vm307, %v670, 0
    %680 = vmatprep.subr.mxu0 0.0
    %681 = vmatpush1.msra.mxu0 0.0
    %682 = vmatprep.subr.mxu0 0.0
    %683 = vmatpush1.msra.mxu0 0.0
    %684 = vmatprep.subr.mxu0 0.0
    %685 = vmatpush1.msra.mxu0 0.0
    %686 = vmatprep.subr.mxu0 0.0
    %687 = vmatpush1.msra.mxu0 0.0
    %688 = vmatprep.subr.mxu0 0.0
    %689 = vmatpush1.msra.mxu0 0.0
    %690 = vmatprep.subr.mxu0 0.0
    %691 = vmatpush1.msra.mxu0 0.0
    %692 = vmatprep.subr.mxu0 0.0
    %693 = vmatpush1.msra.mxu0 0.0
    %694 = vmatprep.subr.mxu0 0.0
    %695 = vmatpush1.msra.mxu0 0.0
    %696 = vmatprep.subr.mxu0 %v669
    %697 = vmatpush1.msra.mxu0 %v668
    %698 = vmatprep.subr.mxu0 %v667
    %699 = vmatpush1.msra.mxu0 %v666
    %700 = vmatprep.subr.mxu0 %v665
    %701 = vmatpush1.msra.mxu0 %v664
    %702 = vmatprep.subr.mxu0 %v663
    %703 = vmatpush1.msra.mxu0 %v662
    %704 = vmatprep.subr.mxu0 %v661
    %705 = vmatpush1.msra.mxu0 %v660
    %706 = vmatprep.subr.mxu0 %v659
    %707 = vmatpush1.msra.mxu0 %v658
    %708 = vmatprep.subr.mxu0 %v657
    %709 = vmatpush1.msra.mxu0 %v656
    %710 = vmatprep.subr.mxu0 %v655
    %711 = vmatpush1.msra.mxu0 %v654
    %712 = vmatprep.subr.mxu0 0.0
    %713 = vmatpush2.msra.mxu0 0.0
    %714 = vmatprep.subr.mxu0 0.0
    %715 = vmatpush2.msra.mxu0 0.0
    %716 = vmatprep.subr.mxu0 0.0
    %717 = vmatpush2.msra.mxu0 0.0
    %718 = vmatprep.subr.mxu0 0.0
    %719 = vmatpush2.msra.mxu0 0.0
    %720 = vmatprep.subr.mxu0 0.0
    %721 = vmatpush2.msra.mxu0 0.0
    %722 = vmatprep.subr.mxu0 0.0
    %723 = vmatpush2.msra.mxu0 0.0
    %724 = vmatprep.subr.mxu0 0.0
    %725 = vmatpush2.msra.mxu0 0.0
    %726 = vmatprep.subr.mxu0 0.0
    %727 = vmatpush2.msra.mxu0 0.0
    %728 = vmatprep.subr.mxu0 0.0
    %729 = vmatpush2.msra.mxu0 0.0
    %730 = vmatprep.subr.mxu0 0.0
    %731 = vmatpush2.msra.mxu0 0.0
    %732 = vmatprep.subr.mxu0 0.0
    %733 = vmatpush2.msra.mxu0 0.0
    %734 = vmatprep.subr.mxu0 0.0
    %735 = vmatpush2.msra.mxu0 0.0
    %736 = vmatprep.subr.mxu0 0.0
    %737 = vmatpush2.msra.mxu0 0.0
    %738 = vmatprep.subr.mxu0 0.0
    %739 = vmatpush2.msra.mxu0 0.0
    %740 = vmatprep.subr.mxu0 0.0
    %741 = vmatpush2.msra.mxu0 0.0
    %742 = vmatprep.subr.mxu0 0.0
    %743 = vmatpush2.msra.mxu0 0.0
    %744 = vmatprep.mubr.f32.mxu0 0.0
    %745 = vmatmul.mubr.f32.gmra.mxu0 %v678
    %v746 = vpop.f32.mrf.mxu0
    %v747 = vadd.f32 %v675, %v746
    %v748 = vpop.f32.mrf.mxu0
    %v749 = vadd.f32 %v675, %v748
    %750 = vdwg.mxu0
    %v753 = vcombine.low %v747, %v749
    %v755 = vunpack.c.l.s4 1983009808
    %v756 = vunpack.c.0.s8 %v755
    %v757 = vlaneseq
    %v758 = vshrl.u32 %v757, 7
    %v759 = vsub.s32 %v756, %v758
    %v760 = vrot.slane %v753, %v759
    %762 = vst [vmem:[#allocation2] sm:$0xf] %v760
    // Predicated region
    $region38: #{tpu_custom_call.1} parent=1 // pred_check
      _
    $region39: #{tpu_custom_call.1} parent=1 // pred_check_branch
      %764 = sbr.rel (0) target = $region41
    $region40: #{tpu_custom_call.1} parent=1 // pred_region
      %s766 = ssub.s32 64, 64
      %767 = vsyncadd [#allocation3], %s766
      %s769 = sshll.u32 [#allocation2], 4
      %s770 = int_to_ptr.vmem [resolvable:$true] %s769
      %772 = dma.vmem_to_hbm [thread:$0]  %s770, 64, %s9, [#allocation3]
    $region41: #{tpu_custom_call.1} parent=1 // pred_fallthru
      _
    // Predicated region
    $region42: #{tpu_custom_call.1} parent=1 // pred_check
      _
    $region43: #{tpu_custom_call.1} parent=1 // pred_check_branch
      %774 = sbr.rel (0) target = $region45
    $region44: #{tpu_custom_call.1} parent=1 // pred_region
      %775 = dma.done [#allocation3], 64
    $region45: #{tpu_custom_call.1} parent=1 // pred_fallthru
      _
    %776 = vsyncpa [#allocation3], 1

</llo_original>
